<compile_context>
chip_gen: v7x
topology: tpu7x:2x2x1
jax: 0.10.0
libtpu: 0.0.40
codegen_flags: <defaults>
</compile_context>

<pallas_src>
import functools

import jax
import jax.numpy as jnp
from jax.experimental import pallas as pl
from jax.experimental.pallas import tpu as pltpu

EPS = 1e-6
_VMEM_LIMIT = 32 * 1024 * 1024  # plenty of headroom; fits every TPU generation


# --------------------------------------------------------------------------- #
# Kernels
# --------------------------------------------------------------------------- #
def _apply_kernel(x_ref, eff_ref, loc_ref, o_ref):
    """h = eff_scale[row] * (x + loc[row]) on one (row_block, lane_block) tile.

    x_ref   : (RB, TL)  input tile
    eff_ref : (RB, 1)   per-(n,c)-row effective scale
    loc_ref : (RB, 1)   per-(n,c)-row loc
    o_ref   : (RB, TL)  output tile
    Exactly one big load, one add, one mul, one store per vreg (v5e friendly);
    the astype calls are no-ops for f32 inputs.
    """
    x = x_ref[...].astype(jnp.float32)
    o_ref[...] = (eff_ref[...] * (x + loc_ref[...])).astype(o_ref.dtype)


def _stats_kernel(x_ref, s_ref, ss_ref, *, hw, tl, mask_lanes):
    """Per-row sum and sum-of-squares, accumulated over the lane grid axis.

    Grid = (row_blocks, lane_blocks); lane axis is the reduction ("arbitrary",
    last).  s_ref / ss_ref blocks are resident across the reduction axis and
    double as the accumulators (init at step 0).
    """
    t = pl.program_id(1)

    @pl.when(t == 0)
    def _():
        s_ref[...] = jnp.zeros_like(s_ref)
        ss_ref[...] = jnp.zeros_like(ss_ref)

    x = x_ref[...].astype(jnp.float32)
    if mask_lanes:
        # Partial edge tile along the lane axis: zero out the padded lanes so
        # they do not pollute the reduction.
        lane = jax.lax.broadcasted_iota(jnp.int32, x.shape, 1)
        x = jnp.where(t * tl + lane < hw, x, 0.0)

    s_ref[...] = s_ref[...] + jnp.sum(x, axis=1, keepdims=True)
    ss_ref[...] = ss_ref[...] + jnp.sum(x * x, axis=1, keepdims=True)


# --------------------------------------------------------------------------- #
# pallas_call wrappers
# --------------------------------------------------------------------------- #
def _pick_tiles(nc, hw, dtype_bytes):
    """Block sizes satisfying the (8, 128) rule with ~<=1 MiB input tiles."""
    tl = hw if hw <= 2048 else 2048                      # mult of 128 or full dim
    if nc <= 8:
        rb = nc                                          # full dim (legal)
    else:
        rows_for_budget = max(8, (1024 * 1024) // max(1, tl * dtype_bytes))
        rb = max(8, (min(nc, rows_for_budget) // 8) * 8)  # multiple of 8
    return rb, tl


def _tiled_apply(x2d, eff_row, loc_row, *, rb, tl):
    nc, hw = x2d.shape
    grid = (pl.cdiv(nc, rb), pl.cdiv(hw, tl))
    return pl.pallas_call(
        _apply_kernel,
        grid=grid,
        in_specs=[
            pl.BlockSpec((rb, tl), lambda r, t: (r, t)),
            pl.BlockSpec((rb, 1), lambda r, t: (r, 0)),
            pl.BlockSpec((rb, 1), lambda r, t: (r, 0)),
        ],
        out_specs=pl.BlockSpec((rb, tl), lambda r, t: (r, t)),
        out_shape=jax.ShapeDtypeStruct((nc, hw), x2d.dtype),
        compiler_params=pltpu.CompilerParams(
            dimension_semantics=("parallel", "parallel"),
            vmem_limit_bytes=_VMEM_LIMIT,
        ),
    )(x2d, eff_row, loc_row)


def _row_stats(x2d, *, rb, tl):
    nc, hw = x2d.shape
    grid = (pl.cdiv(nc, rb), pl.cdiv(hw, tl))
    kernel = functools.partial(
        _stats_kernel, hw=hw, tl=tl, mask_lanes=(hw % tl != 0)
    )
    return pl.pallas_call(
        kernel,
        grid=grid,
        in_specs=[pl.BlockSpec((rb, tl), lambda r, t: (r, t))],
        out_specs=[
            pl.BlockSpec((rb, 1), lambda r, t: (r, 0)),
            pl.BlockSpec((rb, 1), lambda r, t: (r, 0)),
        ],
        out_shape=[
            jax.ShapeDtypeStruct((nc, 1), jnp.float32),
            jax.ShapeDtypeStruct((nc, 1), jnp.float32),
        ],
        compiler_params=pltpu.CompilerParams(
            dimension_semantics=("parallel", "arbitrary"),
            vmem_limit_bytes=_VMEM_LIMIT,
        ),
    )(x2d)


# --------------------------------------------------------------------------- #
# Forward (reverse=False) of GIN2ActNorm
# --------------------------------------------------------------------------- #
def gin2_actnorm_forward(x, loc, scale, *, initialized=False, logdet=False):
    """Returns (h [, logdet]), new_loc, new_scale (new params == inputs if initialized)."""
    squeeze = (x.ndim == 2)
    if squeeze:
        x = x[:, :, None, None]
    n, c, h, w = x.shape
    hw = h * w
    nc = n * c
    m = n * hw

    # Free reshape of the native contiguous NCHW layout -- no transposes.
    x2d = x.reshape(nc, hw)
    rb, tl = _pick_tiles(nc, hw, jnp.dtype(x.dtype).itemsize)

    if not initialized:
        # One tiled HBM pass for per-row sum / sum-of-squares (f32 accumulation),
        # then C-length scalar math in the wrapper.
        rowsum, rowsumsq = _row_stats(x2d, rb=rb, tl=tl)
        sum_c = rowsum.reshape(n, c).sum(axis=0)
        sumsq_c = rowsumsq.reshape(n, c).sum(axis=0)
        mean_c = sum_c / m
        # torch.std default: unbiased (divide by M-1).  NaN for M==1, like torch.
        var_c = jnp.maximum((sumsq_c - m * mean_c * mean_c) / (m - 1), 0.0)
        std_c = jnp.sqrt(var_c)
        loc_c = -mean_c
        alpha = jnp.prod(std_c + EPS)
        scale_c = alpha / (std_c + EPS)
        new_loc = loc_c.reshape(1, c, 1, 1).astype(x.dtype)
        new_scale = scale_c.reshape(1, c, 1, 1).astype(x.dtype)
    else:
        loc_c = loc.reshape(c).astype(jnp.float32)
        scale_c = scale.reshape(c).astype(jnp.float32)
        new_loc, new_scale = loc, scale

    # get_scale(): scale / (prod_over_channels(scale) + eps).
    # Hoisted out of the per-tile kernel body (C-length wrapper-side math).
    eff_c = scale_c / (jnp.prod(scale_c) + EPS)

    # Expand per-channel params to per-(n, c) row params for the (N*C, H*W)
    # layout.  This is N*C floats -- negligible HBM traffic.
    eff_row = jnp.broadcast_to(eff_c[None, :], (n, c)).reshape(nc, 1).astype(jnp.float32)
    loc_row = jnp.broadcast_to(loc_c[None, :], (n, c)).reshape(nc, 1).astype(jnp.float32)

    h2d = _tiled_apply(x2d, eff_row, loc_row, rb=rb, tl=tl)
    out = h2d.reshape(n, c, h, w)
    if squeeze:
        out = out[:, :, 0, 0]
    if logdet:
        return (out, jnp.zeros((n,), x.dtype)), new_loc, new_scale
    return out, new_loc, new_scale


# --------------------------------------------------------------------------- #
# Pure-JAX reference (mirrors the PyTorch module)
# --------------------------------------------------------------------------- #
def _ref_forward(x, loc, scale, initialized):
    squeeze = (x.ndim == 2)
    if squeeze:
        x = x[:, :, None, None]
    n, c, h, w = x.shape
    if not initialized:
        flat = jnp.transpose(x, (1, 0, 2, 3)).reshape(c, -1)
        mean = flat.mean(axis=1)
        std = flat.std(axis=1, ddof=1)
        loc = (-mean).reshape(1, c, 1, 1)
        alpha = jnp.prod(std + EPS)
        scale = (alpha / (std + EPS)).reshape(1, c, 1, 1)
    total = jnp.prod(scale, axis=1, keepdims=True)
    eff = scale / (total + EPS)
    out = eff * (x + loc)
    if squeeze:
        out = out[:, :, 0, 0]
    return out, loc, scale


def _check_case(key, shape):
    n, c, _, _ = shape
    x = jax.random.normal(key, shape, dtype=jnp.float32) * 2.0 + 0.5
    loc0 = jnp.zeros((1, c, 1, 1), jnp.float32)
    scale0 = jnp.ones((1, c, 1, 1), jnp.float32)

    # First call: data-dependent init + apply.
    h1, loc1, scale1 = gin2_actnorm_forward(x, loc0, scale0, initialized=False)
    h1 = jax.block_until_ready(h1)
    # Second call: already initialized -> plain actnorm apply.
    h2, _, _ = gin2_actnorm_forward(x, loc1, scale1, initialized=True)
    h2 = jax.block_until_ready(h2)

    r1, rloc, rscale = _ref_forward(x, loc0, scale0, initialized=False)
    r2, _, _ = _ref_forward(x, rloc, rscale, initialized=True)

    ok = lambda a, b: jnp.allclose(a, b, atol=1e-5, rtol=1e-4)
    assert ok(h1, r1), "init-path output mismatch"
    assert ok(loc1, rloc), "loc mismatch"
    assert ok(scale1, rscale), "scale mismatch"
    assert ok(h2, r2), "initialized-path output mismatch"
    assert ok(h1, h2), "init vs initialized path mismatch"


if __name__ == "__main__":
    key = jax.random.PRNGKey(0)
    k1, k2 = jax.random.split(key)
    # Primary small case matching the module's typical usage.
    _check_case(k1, (2, 4, 16, 16))
    # Extra case exercising multi-tile grid + partial edge blocks + masking.
    _check_case(k2, (2, 8, 63, 33))
    print("KERNEL_OK")
</pallas_src>

<mosaic_0001>
module attributes {stable_mosaic.version = 11 : i64} {
  func.func @_stats_kernel(%arg0: i32, %arg1: i32, %arg2: memref<8x256xf32, #tpu.memory_space<vmem>>, %arg3: memref<8x1xf32, #tpu.memory_space<vmem>>, %arg4: memref<8x1xf32, #tpu.memory_space<vmem>>) attributes {dimension_semantics = [#tpu.dimension_semantics<parallel>, #tpu.dimension_semantics<arbitrary>], iteration_bounds = array<i64: 1, 1>, scalar_prefetch = 0 : i64, scratch_operands = 0 : i64, tpu.core_type = #tpu.core_type<tc>, window_params = [{transform_indices = @transform_0, window_bounds = array<i64: 8, 256>}, {transform_indices = @transform_1, window_bounds = array<i64: 8, 1>}, {transform_indices = @transform_2, window_bounds = array<i64: 8, 1>}]} {
    %c0_i32 = arith.constant 0 : i32
    %0 = arith.cmpi eq, %arg1, %c0_i32 : i32
    %1 = arith.extui %0 : i1 to i32
    %c0_i32_0 = arith.constant 0 : i32
    %2 = arith.cmpi ne, %1, %c0_i32_0 : i32
    scf.if %2 {
      %cst_11 = arith.constant 0.000000e+00 : f32
      %15 = vector.broadcast %cst_11 : f32 to vector<8x1xf32>
      %c0_12 = arith.constant 0 : index
      %c0_13 = arith.constant 0 : index
      %16 = vector.load %arg3[%c0_12, %c0_13] : memref<8x1xf32, #tpu.memory_space<vmem>>, vector<8x1xf32>
      tpu.vector_store %arg3[%c0_12, %c0_13], %15 {strides = array<i32>} : memref<8x1xf32, #tpu.memory_space<vmem>>, vector<8x1xf32>,
      %cst_14 = arith.constant 0.000000e+00 : f32
      %17 = vector.broadcast %cst_14 : f32 to vector<8x1xf32>
      %c0_15 = arith.constant 0 : index
      %c0_16 = arith.constant 0 : index
      %18 = vector.load %arg4[%c0_15, %c0_16] : memref<8x1xf32, #tpu.memory_space<vmem>>, vector<8x1xf32>
      tpu.vector_store %arg4[%c0_15, %c0_16], %17 {strides = array<i32>} : memref<8x1xf32, #tpu.memory_space<vmem>>, vector<8x1xf32>,
    } else {
    }
    %c0 = arith.constant 0 : index
    %c0_1 = arith.constant 0 : index
    %3 = vector.load %arg2[%c0, %c0_1] : memref<8x256xf32, #tpu.memory_space<vmem>>, vector<8x256xf32>
    %c0_2 = arith.constant 0 : index
    %c0_3 = arith.constant 0 : index
    %4 = vector.load %arg3[%c0_2, %c0_3] : memref<8x1xf32, #tpu.memory_space<vmem>>, vector<8x1xf32>
    %cst = arith.constant dense<0.000000e+00> : vector<8xf32>
    %5 = vector.multi_reduction <add>, %3, %cst [1] : vector<8x256xf32> to vector<8xf32>
    %6 = vector.shape_cast %5 : vector<8xf32> to vector<8x1xf32>
    %7 = arith.addf %4, %6 : vector<8x1xf32>
    %c0_4 = arith.constant 0 : index
    %c0_5 = arith.constant 0 : index
    %8 = vector.load %arg3[%c0_4, %c0_5] : memref<8x1xf32, #tpu.memory_space<vmem>>, vector<8x1xf32>
    tpu.vector_store %arg3[%c0_4, %c0_5], %7 {strides = array<i32>} : memref<8x1xf32, #tpu.memory_space<vmem>>, vector<8x1xf32>,
    %c0_6 = arith.constant 0 : index
    %c0_7 = arith.constant 0 : index
    %9 = vector.load %arg4[%c0_6, %c0_7] : memref<8x1xf32, #tpu.memory_space<vmem>>, vector<8x1xf32>
    %10 = arith.mulf %3, %3 : vector<8x256xf32>
    %cst_8 = arith.constant dense<0.000000e+00> : vector<8xf32>
    %11 = vector.multi_reduction <add>, %10, %cst_8 [1] : vector<8x256xf32> to vector<8xf32>
    %12 = vector.shape_cast %11 : vector<8xf32> to vector<8x1xf32>
    %13 = arith.addf %9, %12 : vector<8x1xf32>
    %c0_9 = arith.constant 0 : index
    %c0_10 = arith.constant 0 : index
    %14 = vector.load %arg4[%c0_9, %c0_10] : memref<8x1xf32, #tpu.memory_space<vmem>>, vector<8x1xf32>
    tpu.vector_store %arg4[%c0_9, %c0_10], %13 {strides = array<i32>} : memref<8x1xf32, #tpu.memory_space<vmem>>, vector<8x1xf32>,
    return
  }
  func.func @transform_0(%arg0: i32, %arg1: i32) -> (i32, i32) {
    %c0_i32 = arith.constant 0 : i32
    return %arg0, %arg1 : i32, i32
  }
  func.func @transform_1(%arg0: i32, %arg1: i32) -> (i32, i32) {
    %c0_i32 = arith.constant 0 : i32
    %c0_i32_0 = arith.constant 0 : i32
    return %arg0, %c0_i32 : i32, i32
  }
  func.func @transform_2(%arg0: i32, %arg1: i32) -> (i32, i32) {
    %c0_i32 = arith.constant 0 : i32
    %c0_i32_0 = arith.constant 0 : i32
    return %arg0, %c0_i32 : i32, i32
  }
}

</mosaic_0001>

<llo_original>
// kernel: tpu_custom_call.1
$region0: #{tpu_custom_call.1}
  #allocation0 [shape = 'u32[]', space=smem, size = 0x4, offset = 0x4, fixed_abs, tag = 'smem constant byte address 0x4 - core index']
  #allocation1 [shape = 'u32[144,128]{1,0:T(1,128)}', space=vmem, size = 0x12000, scoped, tag = 'internal scratch']
  %s0 = inlined_call_operand.hbm [shape: f32[8,256], index: 0, kind: input, shape index: {}]
  %s1 = inlined_call_operand.vmem [shape: f32[8,1], index: 1, kind: output, shape index: {0}]
  %s2 = inlined_call_operand.vmem [shape: f32[8,1], index: 2, kind: output, shape index: {1}]
  %3 = xla_tuple %s1, %s2
  %s4 = sld [smem:[#allocation0]]
  $region30: #{tpu_custom_call.1} parent=0
    _
  %s6 = ssub.s32 1, %s4
  %s7 = scalar_select 0, %s6, %s4
  $region1: #{tpu_custom_call.1} parent=0
    #allocation2 [shape = 'u8[8192]{0}', space=vmem, size = 0x2000, scoped, tag = 'input window, operand 0, single buffered']
    #allocation3 [shape = 's32[1]{0}', space=sflag, size = 0x4, scoped, tag = 'scoped memory for tpu_custom_call.1']
    %8 = vsyncpa [#allocation3], 0
    // Predicated region
    $region2: #{tpu_custom_call.1} parent=1 // pred_check
      _
    $region3: #{tpu_custom_call.1} parent=1 // pred_check_branch
      %10 = sbr.rel (0) target = $region5
    $region4: #{tpu_custom_call.1} parent=1 // pred_region
      %s12 = ssub.s32 256, 256
      %13 = vsyncadd [#allocation3], %s12
      %s15 = sshll.u32 [#allocation2], 4
      %s16 = int_to_ptr.vmem [resolvable:$true] %s15
      %18 = dma.hbm_to_vmem [thread:$0]  %s0, 256, %s16, [#allocation3]
    $region5: #{tpu_custom_call.1} parent=1 // pred_fallthru
      _
    // Predicated region
    $region6: #{tpu_custom_call.1} parent=1 // pred_check
      _
    $region7: #{tpu_custom_call.1} parent=1 // pred_check_branch
      %20 = sbr.rel (0) target = $region9
    $region8: #{tpu_custom_call.1} parent=1 // pred_region
      %21 = dma.done [#allocation3], 256
    $region9: #{tpu_custom_call.1} parent=1 // pred_fallthru
      _
    %p22 = scmp.eq.s32.totalorder 0, 0
    // Predicated region
    $region10: #{tpu_custom_call.1} parent=1 // pred_check
      %p23 = pneg %p22
    $region11: #{tpu_custom_call.1} parent=1 // pred_check_branch
      %25 = sbr.rel (%p23) target = $region13
    $region12: #{tpu_custom_call.1} parent=1 // pred_region
      %vm26 = vcmask 7168
      %27 = vst.msk [vmem:[%s1] sm:$0xff] %vm26, 0.0
      %28 = vst.msk [vmem:[%s2] sm:$0xff] %vm26, 0.0
    $region13: #{tpu_custom_call.1} parent=1 // pred_fallthru
      _
    %v29 = vld [vmem:[#allocation2] sm:$0xff]
    %v30 = vld [vmem:[#allocation2 + $0x8] sm:$0xff]
    %v31 = vld [vmem:[%s1] sm:$0xff]
    %v32 = vadd.f32 %v29, %v30
    %33 = vadd.xlane.f32.xlu0 %v32
    %v34 = vpop.xlane.xlu0 %33
    %v35 = vadd.f32 %v31, %v34
    %vm36 = vcmask 7168
    %37 = vst.msk [vmem:[%s1] sm:$0xff] %vm36, %v35
    %v38 = vld [vmem:[%s2] sm:$0xff]
    %v39 = vmul.f32 %v29, %v29
    %v40 = vmul.f32 %v30, %v30
    %v41 = vadd.f32 %v39, %v40
    %42 = vadd.xlane.f32.xlu0 %v41
    %v43 = vpop.xlane.xlu0 %42
    %v44 = vadd.f32 %v38, %v43
    %45 = vst.msk [vmem:[%s2] sm:$0xff] %vm36, %v44
    // Predicated region
    $region14: #{tpu_custom_call.1} parent=1 // pred_check
      _
    $region15: #{tpu_custom_call.1} parent=1 // pred_check_branch
      %47 = sbr.rel (0) target = $region17
    $region16: #{tpu_custom_call.1} parent=1 // pred_region
      _
    $region17: #{tpu_custom_call.1} parent=1 // pred_fallthru
      _
    // Predicated region
    $region18: #{tpu_custom_call.1} parent=1 // pred_check
      _
    $region19: #{tpu_custom_call.1} parent=1 // pred_check_branch
      %49 = sbr.rel (0) target = $region21
    $region20: #{tpu_custom_call.1} parent=1 // pred_region
      _
    $region21: #{tpu_custom_call.1} parent=1 // pred_fallthru
      _
    // Predicated region
    $region22: #{tpu_custom_call.1} parent=1 // pred_check
      _
    $region23: #{tpu_custom_call.1} parent=1 // pred_check_branch
      %51 = sbr.rel (0) target = $region25
    $region24: #{tpu_custom_call.1} parent=1 // pred_region
      _
    $region25: #{tpu_custom_call.1} parent=1 // pred_fallthru
      _
    // Predicated region
    $region26: #{tpu_custom_call.1} parent=1 // pred_check
      _
    $region27: #{tpu_custom_call.1} parent=1 // pred_check_branch
      %53 = sbr.rel (0) target = $region29
    $region28: #{tpu_custom_call.1} parent=1 // pred_region
      _
    $region29: #{tpu_custom_call.1} parent=1 // pred_fallthru
      _
    %54 = vsyncpa [#allocation3], 1

</llo_original>
